<compile_context>
chip_gen: v6e
topology: v6e:2x2x1
jax: 0.10.0
libtpu: 0.0.40
codegen_flags: <defaults>
</compile_context>

<pallas_src>
import functools

import jax
import jax.numpy as jnp
from jax.experimental import pallas as pl
from jax.experimental.pallas import tpu as pltpu

C_IN, C_MID, C_OUT, N_CLS = 128, 256, 512, 2
BN_EPS = 1e-5


def _pooled_h1_kernel(x_ref, w1t_ref, b1_ref, out_ref, *, hw, tile_hw):
    # x_ref:   (1, C_IN, tile_hw) f32  (cast to bf16 for the MXU)
    # w1t_ref: (C_MID, C_IN)      bf16 (conv_a1 weight, [out, in]) -- VMEM resident
    # b1_ref:  (C_MID, 1)         f32                              -- VMEM resident
    # out_ref: (1, C_MID, 1)      f32 accumulator of sum_{hw} relu(conv_a1(x))
    t = pl.program_id(1)

    @pl.when(t == 0)
    def _init():
        out_ref[...] = jnp.zeros_like(out_ref)

    x = x_ref[0].astype(jnp.bfloat16)                              # (C_IN, tile_hw)
    h1 = jnp.dot(w1t_ref[...], x,
                 preferred_element_type=jnp.float32)               # (C_MID, tile_hw)
    h1 = jnp.maximum(h1 + b1_ref[...], 0.0)

    if hw % tile_hw != 0:
        # Static: only traced when the last tile is ragged.  Columns past H*W
        # contain unspecified data (edge block) and are zeroed before the sum.
        valid = jnp.minimum(hw - t * tile_hw, tile_hw)
        lane = jax.lax.broadcasted_iota(jnp.int32, (1, tile_hw), 1)
        h1 = jnp.where(lane < valid, h1, 0.0)

    out_ref[...] += jnp.sum(h1, axis=1, keepdims=True)[None]       # (1, C_MID, 1)


def _pick_tile_hw(hw):
    # Largest lane-friendly tile; per-step overhead ~0.35us so bigger is better.
    if hw <= 2048:
        return hw                      # single full tile (lane dim == array dim)
    for cand in (2048, 1792, 1536, 1280, 1024, 896, 768, 640, 512, 384, 256, 128):
        if hw % cand == 0:
            return cand
    return 2048                        # ragged last tile handled by in-kernel mask


def head_acoustic_forward(x_nchw, params, *, tile_hw=None):
    """x_nchw: (N, 128, H, W) float32 -> (N, 2) float32 (eval-mode forward)."""
    N, C, H, W = x_nchw.shape
    assert C == C_IN
    HW = H * W
    if tile_hw is None:
        tile_hw = _pick_tile_hw(HW)
    assert tile_hw == HW or tile_hw % 128 == 0, "tile_hw must be H*W or a multiple of 128"
    num_t = pl.cdiv(HW, tile_hw)

    x_r = x_nchw.reshape(N, C_IN, HW)             # NCHW -> (N, C, HW): free reshape
    w1t = params["w1t"].astype(jnp.bfloat16)      # (C_MID, C_IN)
    b1 = params["b1"].reshape(C_MID, 1).astype(jnp.float32)

    kernel = functools.partial(_pooled_h1_kernel, hw=HW, tile_hw=tile_hw)

    flops = 2 * N * HW * C_IN * C_MID
    bytes_accessed = x_r.size * 4 + w1t.size * 2 + b1.size * 4 + N * C_MID * 4

    pooled_sum = pl.pallas_call(
        kernel,
        out_shape=jax.ShapeDtypeStruct((N, C_MID, 1), jnp.float32),
        grid_spec=pltpu.PrefetchScalarGridSpec(
            num_scalar_prefetch=0,
            grid=(N, num_t),
            in_specs=[
                pl.BlockSpec((1, C_IN, tile_hw), lambda n, t: (n, 0, t)),
                pl.BlockSpec((C_MID, C_IN), lambda n, t: (0, 0)),
                pl.BlockSpec((C_MID, 1), lambda n, t: (0, 0)),
            ],
            out_specs=pl.BlockSpec((1, C_MID, 1), lambda n, t: (n, 0, 0)),
        ),
        compiler_params=pltpu.CompilerParams(
            dimension_semantics=("parallel", "arbitrary"),
            vmem_limit_bytes=32 * 1024 * 1024,
        ),
        cost_estimate=pl.CostEstimate(flops=flops, transcendentals=0,
                                      bytes_accessed=bytes_accessed),
    )(x_r, w1t, b1)

    pooled_h1 = pooled_sum.reshape(N, C_MID) * (1.0 / float(HW))   # mean over H*W

    # Fold conv_a2 + BatchNorm2d(eval) + fc_a into a single (C_MID, N_CLS) affine.
    s = params["bn_gamma"] / jnp.sqrt(params["bn_var"] + BN_EPS)          # (512,)
    w_fold = (params["w2"] * s[None, :]) @ params["wfc"]                  # (256, 2)
    b_fold = (params["b2"] * s + params["bn_beta"]
              - params["bn_mean"] * s) @ params["wfc"] + params["bfc"]    # (2,)
    # Tiny lane-sparse (N, 2) result stays in plain XLA (avoids masked stores).
    return pooled_h1 @ w_fold + b_fold


def init_params(key):
    ks = jax.random.split(key, 8)
    return {
        # conv_a1: torch weight (256,128,1,1) -> stored as (256,128) [out, in]
        "w1t": jax.random.normal(ks[0], (C_MID, C_IN), jnp.float32) * 0.05,
        "b1": jax.random.normal(ks[1], (C_MID,), jnp.float32) * 0.05,
        # conv_a2: torch weight (512,256,1,1) -> matmul form (256,512) [in, out]
        "w2": jax.random.normal(ks[2], (C_MID, C_OUT), jnp.float32) * 0.05,
        "b2": jax.random.normal(ks[3], (C_OUT,), jnp.float32) * 0.05,
        # bn_a (eval mode running stats + affine)
        "bn_gamma": 1.0 + 0.1 * jax.random.normal(ks[4], (C_OUT,), jnp.float32),
        "bn_beta": 0.1 * jax.random.normal(ks[5], (C_OUT,), jnp.float32),
        "bn_mean": 0.1 * jax.random.normal(ks[6], (C_OUT,), jnp.float32),
        "bn_var": jnp.abs(1.0 + 0.1 * jax.random.normal(ks[7], (C_OUT,), jnp.float32)),
        # fc_a: torch weight (2,512) -> (512,2)
        "wfc": jax.random.normal(jax.random.fold_in(key, 100),
                                 (C_OUT, N_CLS), jnp.float32) * 0.05,
        "bfc": jax.random.normal(jax.random.fold_in(key, 101),
                                 (N_CLS,), jnp.float32) * 0.05,
    }


def reference_forward(x_nchw, params):
    # Pure-JAX f32 reference matching the PyTorch module's eval-mode forward.
    N, C, H, W = x_nchw.shape
    x = jnp.transpose(x_nchw, (0, 2, 3, 1)).reshape(N * H * W, C)
    h1 = jnp.maximum(x @ params["w1t"].T + params["b1"], 0.0)
    h2 = h1 @ params["w2"] + params["b2"]
    inv_std = 1.0 / jnp.sqrt(params["bn_var"] + BN_EPS)
    h2 = (h2 - params["bn_mean"]) * inv_std * params["bn_gamma"] + params["bn_beta"]
    pooled = h2.reshape(N, H * W, -1).mean(axis=1)
    return pooled @ params["wfc"] + params["bfc"]


if __name__ == "__main__":
    key = jax.random.PRNGKey(0)
    params = init_params(jax.random.fold_in(key, 1))

    # Case 1: 16x16 spatial, tile_hw=128 -> 2 HW tiles (exercises the accumulator
    # across the "arbitrary" grid axis).
    x1 = jax.random.normal(jax.random.fold_in(key, 2), (2, C_IN, 16, 16), jnp.float32)
    out1 = head_acoustic_forward(x1, params, tile_hw=128)
    jax.block_until_ready(out1)
    ref1 = reference_forward(x1, params)
    assert out1.shape == (2, N_CLS)
    assert jnp.allclose(out1, ref1, atol=2e-2, rtol=2e-2), (
        f"case1 max abs err {jnp.max(jnp.abs(out1 - ref1))}")

    # Case 2: ragged H*W (16x20 = 320, tile 128 -> masked last tile).
    x2 = jax.random.normal(jax.random.fold_in(key, 3), (2, C_IN, 16, 20), jnp.float32)
    out2 = head_acoustic_forward(x2, params, tile_hw=128)
    jax.block_until_ready(out2)
    ref2 = reference_forward(x2, params)
    assert jnp.allclose(out2, ref2, atol=2e-2, rtol=2e-2), (
        f"case2 max abs err {jnp.max(jnp.abs(out2 - ref2))}")

    print("KERNEL_OK")
</pallas_src>

<mosaic_0001>
module attributes {stable_mosaic.version = 11 : i64} {
  func.func @_pooled_h1_kernel(%arg0: i32, %arg1: i32, %arg2: memref<1x128x128xf32, #tpu.memory_space<vmem>>, %arg3: memref<256x128xbf16, #tpu.memory_space<vmem>>, %arg4: memref<256x1xf32, #tpu.memory_space<vmem>>, %arg5: memref<1x256x1xf32, #tpu.memory_space<vmem>>) attributes {dimension_semantics = [#tpu.dimension_semantics<parallel>, #tpu.dimension_semantics<arbitrary>], iteration_bounds = array<i64: 2, 2>, scalar_prefetch = 0 : i64, scratch_operands = 0 : i64, tpu.core_type = #tpu.core_type<tc>, window_params = [{transform_indices = @transform_0, window_bounds = array<i64: 1, 128, 128>}, {pipeline_mode = #tpu.pipeline_mode<synchronous>, transform_indices = @transform_1, window_bounds = array<i64: 256, 128>}, {pipeline_mode = #tpu.pipeline_mode<synchronous>, transform_indices = @transform_2, window_bounds = array<i64: 256, 1>}, {transform_indices = @transform_3, window_bounds = array<i64: 1, 256, 1>}]} {
    %c0_i32 = arith.constant 0 : i32
    %0 = arith.cmpi eq, %arg1, %c0_i32 : i32
    %1 = arith.extui %0 : i1 to i32
    %c0_i32_0 = arith.constant 0 : i32
    %2 = arith.cmpi ne, %1, %c0_i32_0 : i32
    scf.if %2 {
      %cst_15 = arith.constant 0.000000e+00 : f32
      %19 = vector.broadcast %cst_15 : f32 to vector<1x256x1xf32>
      %c0_16 = arith.constant 0 : index
      %c0_17 = arith.constant 0 : index
      %c0_18 = arith.constant 0 : index
      %20 = vector.load %arg5[%c0_16, %c0_17, %c0_18] : memref<1x256x1xf32, #tpu.memory_space<vmem>>, vector<1x256x1xf32>
      tpu.vector_store %arg5[%c0_16, %c0_17, %c0_18], %19 {strides = array<i32>} : memref<1x256x1xf32, #tpu.memory_space<vmem>>, vector<1x256x1xf32>,
    } else {
    }
    %c0 = arith.constant 0 : index
    %c0_1 = arith.constant 0 : index
    %c0_2 = arith.constant 0 : index
    %3 = vector.load %arg2[%c0, %c0_1, %c0_2] : memref<1x128x128xf32, #tpu.memory_space<vmem>>, vector<1x128x128xf32>
    %4 = vector.shape_cast %3 : vector<1x128x128xf32> to vector<128x128xf32>
    %5 = arith.truncf %4 : vector<128x128xf32> to vector<128x128xbf16>
    %c0_3 = arith.constant 0 : index
    %c0_4 = arith.constant 0 : index
    %6 = vector.load %arg3[%c0_3, %c0_4] : memref<256x128xbf16, #tpu.memory_space<vmem>>, vector<256x128xbf16>
    %cst = arith.constant dense<0.000000e+00> : vector<256x128xf32>
    %7 = tpu.matmul %6, %5, %cst {dimension_numbers = #tpu.dot_dimension_numbers<[1], [0], [0], [1], [0, 0, 1, 1], [], []>} : vector<256x128xbf16>, vector<128x128xbf16>, vector<256x128xf32> -> vector<256x128xf32>
    %c0_5 = arith.constant 0 : index
    %c0_6 = arith.constant 0 : index
    %8 = vector.load %arg4[%c0_5, %c0_6] : memref<256x1xf32, #tpu.memory_space<vmem>>, vector<256x1xf32>
    %9 = vector.broadcast %8 : vector<256x1xf32> to vector<256x128xf32>
    %10 = arith.addf %7, %9 : vector<256x128xf32>
    %cst_7 = arith.constant 0.000000e+00 : f32
    %11 = vector.broadcast %cst_7 : f32 to vector<256x128xf32>
    %12 = arith.maximumf %10, %11 : vector<256x128xf32>
    %c0_8 = arith.constant 0 : index
    %c0_9 = arith.constant 0 : index
    %c0_10 = arith.constant 0 : index
    %13 = vector.load %arg5[%c0_8, %c0_9, %c0_10] : memref<1x256x1xf32, #tpu.memory_space<vmem>>, vector<1x256x1xf32>
    %cst_11 = arith.constant dense<0.000000e+00> : vector<256xf32>
    %14 = vector.multi_reduction <add>, %12, %cst_11 [1] : vector<256x128xf32> to vector<256xf32>
    %15 = vector.shape_cast %14 : vector<256xf32> to vector<256x1xf32>
    %16 = vector.shape_cast %15 : vector<256x1xf32> to vector<1x256x1xf32>
    %17 = arith.addf %13, %16 : vector<1x256x1xf32>
    %c0_12 = arith.constant 0 : index
    %c0_13 = arith.constant 0 : index
    %c0_14 = arith.constant 0 : index
    %18 = vector.load %arg5[%c0_12, %c0_13, %c0_14] : memref<1x256x1xf32, #tpu.memory_space<vmem>>, vector<1x256x1xf32>
    tpu.vector_store %arg5[%c0_12, %c0_13, %c0_14], %17 {strides = array<i32>} : memref<1x256x1xf32, #tpu.memory_space<vmem>>, vector<1x256x1xf32>,
    return
  }
  func.func @transform_0(%arg0: i32, %arg1: i32) -> (i32, i32, i32) {
    %c0_i32 = arith.constant 0 : i32
    %c0_i32_0 = arith.constant 0 : i32
    return %arg0, %c0_i32, %arg1 : i32, i32, i32
  }
  func.func @transform_1(%arg0: i32, %arg1: i32) -> (i32, i32) {
    %c0_i32 = arith.constant 0 : i32
    %c0_i32_0 = arith.constant 0 : i32
    %c0_i32_1 = arith.constant 0 : i32
    return %c0_i32, %c0_i32_0 : i32, i32
  }
  func.func @transform_2(%arg0: i32, %arg1: i32) -> (i32, i32) {
    %c0_i32 = arith.constant 0 : i32
    %c0_i32_0 = arith.constant 0 : i32
    %c0_i32_1 = arith.constant 0 : i32
    return %c0_i32, %c0_i32_0 : i32, i32
  }
  func.func @transform_3(%arg0: i32, %arg1: i32) -> (i32, i32, i32) {
    %c0_i32 = arith.constant 0 : i32
    %c0_i32_0 = arith.constant 0 : i32
    %c0_i32_1 = arith.constant 0 : i32
    return %arg0, %c0_i32, %c0_i32_0 : i32, i32, i32
  }
}

</mosaic_0001>

<llo_original>
// kernel: tpu_custom_call.1
$region0: #{tpu_custom_call.1}
  #allocation0 [shape = 'u32[]', space=smem, size = 0x4, offset = 0x4, fixed_abs, tag = 'smem constant byte address 0x4 - core index']
  #allocation1 [shape = 'u32[144,128]{1,0:T(1,128)}', space=vmem, size = 0x12000, scoped, tag = 'internal scratch']
  %s0 = inlined_call_operand.hbm [shape: f32[2,128,256], index: 0, kind: input, shape index: {}]
  %s1 = inlined_call_operand.vmem [shape: bf16[256,128], index: 1, kind: input, shape index: {}]
  %s2 = inlined_call_operand.vmem [shape: f32[256,1], index: 2, kind: input, shape index: {}]
  %s3 = inlined_call_operand.vmem [shape: f32[2,256,1], index: 3, kind: output, shape index: {}]
  %s4 = sld [smem:[#allocation0]]
  $region53: #{tpu_custom_call.1} parent=0
    _
  %s6 = ssub.s32 1, %s4
  %s7 = scalar_select 0, %s6, %s4
  $region1: #{tpu_custom_call.1} parent=0
    #allocation2 [shape = 'u8[131072]{0}', space=vmem, size = 0x20000, scoped, tag = 'input window, operand 0']
    #allocation3 [shape = 's32[2]{0}', space=sflag, size = 0x8, scoped, tag = 'scoped memory for tpu_custom_call.1']
    %8 = vsyncpa [#allocation3], 0
    %s9 = scalar_lea.sflag [#allocation3], 1
    %10 = vsyncpa %s9, 0
    loop: start=0, step=1, limit=6
    $region2: #{tpu_custom_call.1} parent=1 // loop_pre_header
      _
    $region3: #{tpu_custom_call.1} parent=1 // loop_header
      %s12 = sphi 0, %s16
      %p13 = scmp.ge.s32.totalorder %s12, 6
      %s19 = sphi 0, %s31
      %s20 = sphi 0, %s27
      %s21 = sphi 0, %s19
      %s22 = sphi 0, %s20
      %s23 = sphi 0, %s21
      %s24 = sphi 0, %s22
      %s36 = sphi 0, %s38
      %s39 = sphi 0, %s36
      %s40 = sphi 0, %s39
      %s56 = sphi 0, %s40
      %s60 = sphi 0, %s60
      %s62 = sphi 0, %s60
      %s63 = sphi 0, %s62
      %s77 = sphi 0, %s63
      %s81 = sphi 0, %s81
      %s83 = sphi 0, %s81
      %s84 = sphi 0, %s83
      %s98 = sphi 0, %s84
      %s104 = sphi 0, %s106
      %s107 = sphi 0, %s104
      %s108 = sphi 0, %s107
      %s124 = sphi 0, %s108
    $region4: #{tpu_custom_call.1} parent=1 // loop_header_branch
      %15 = sbr.rel (%p13) target = $region8
    $region5: #{tpu_custom_call.1} parent=1 // loop_body
      %s17 = ssub.s32 %s12, 1
      %s18 = ssub.s32 %s12, 2
      %s25 = sadd.s32 1, %s20
      %p26 = scmp.ge.s32.totalorder %s25, 2
      %s27 = scalar_select %p26, 0, %s25
      %s28 = sadd.s32 1, %s19
      %s29 = scalar_select %p26, %s28, %s19
      %p30 = scmp.ge.s32.totalorder %s29, 2
      %s31 = scalar_select %p30, 0, %s29
      %s32 = ssub.s32 %s19, %s31
      %s33 = ssub.s32 %s20, %s27
      %s34 = sor.u32 %s32, %s33
      %p35 = scmp.eq.s32.totalorder %s34, 0
      %s37 = sadd.s32 %s36, 1
      %s38 = scalar_select %p35, %s36, %s37
      %p41 = pneg %p35
      %p42 = scmp.eq.s32.totalorder %s12, 3
      %p43 = por %p41, %p42
      %p44 = scmp.ne.s32.totalorder %s36, %s39
      %p45 = scmp.eq.s32.totalorder %s12, 0
      %p46 = por %p44, %p45
      %p47 = scmp.ne.s32.totalorder %s36, %s39
      %p48 = scmp.eq.s32.totalorder %s17, 3
      %p49 = por %p47, %p48
      %p50 = scmp.ne.s32.totalorder %s39, %s40
      %p51 = scmp.eq.s32.totalorder %s17, 0
      %p52 = por %p50, %p51
      %p53 = scmp.ne.s32.totalorder %s39, %s40
      %p54 = scmp.eq.s32.totalorder %s18, 3
      %p55 = por %p53, %p54
      %p57 = scmp.ne.s32.totalorder %s40, %s56
      %p58 = scmp.eq.s32.totalorder %s18, 0
      %p59 = por %p57, %p58
      %s61 = sadd.s32 %s60, 1
      %p64 = scmp.eq.s32.totalorder %s12, 3
      %p65 = scmp.ne.s32.totalorder %s60, %s62
      %p66 = scmp.eq.s32.totalorder %s12, 0
      %p67 = por %p65, %p66
      %p68 = scmp.ne.s32.totalorder %s60, %s62
      %p69 = scmp.eq.s32.totalorder %s17, 3
      %p70 = por %p68, %p69
      %p71 = scmp.ne.s32.totalorder %s62, %s63
      %p72 = scmp.eq.s32.totalorder %s17, 0
      %p73 = por %p71, %p72
      %p74 = scmp.ne.s32.totalorder %s62, %s63
      %p75 = scmp.eq.s32.totalorder %s18, 3
      %p76 = por %p74, %p75
      %p78 = scmp.ne.s32.totalorder %s63, %s77
      %p79 = scmp.eq.s32.totalorder %s18, 0
      %p80 = por %p78, %p79
      %s82 = sadd.s32 %s81, 1
      %p85 = scmp.eq.s32.totalorder %s12, 3
      %p86 = scmp.ne.s32.totalorder %s81, %s83
      %p87 = scmp.eq.s32.totalorder %s12, 0
      %p88 = por %p86, %p87
      %p89 = scmp.ne.s32.totalorder %s81, %s83
      %p90 = scmp.eq.s32.totalorder %s17, 3
      %p91 = por %p89, %p90
      %p92 = scmp.ne.s32.totalorder %s83, %s84
      %p93 = scmp.eq.s32.totalorder %s17, 0
      %p94 = por %p92, %p93
      %p95 = scmp.ne.s32.totalorder %s83, %s84
      %p96 = scmp.eq.s32.totalorder %s18, 3
      %p97 = por %p95, %p96
      %p99 = scmp.ne.s32.totalorder %s84, %s98
      %p100 = scmp.eq.s32.totalorder %s18, 0
      %p101 = por %p99, %p100
      %s102 = ssub.s32 %s19, %s31
      %p103 = scmp.eq.s32.totalorder %s102, 0
      %s105 = sadd.s32 %s104, 1
      %s106 = scalar_select %p103, %s104, %s105
      %p109 = pneg %p103
      %p110 = scmp.eq.s32.totalorder %s12, 3
      %p111 = por %p109, %p110
      %p112 = scmp.ne.s32.totalorder %s104, %s107
      %p113 = scmp.eq.s32.totalorder %s12, 0
      %p114 = por %p112, %p113
      %p115 = scmp.ne.s32.totalorder %s104, %s107
      %p116 = scmp.eq.s32.totalorder %s17, 3
      %p117 = por %p115, %p116
      %p118 = scmp.ne.s32.totalorder %s107, %s108
      %p119 = scmp.eq.s32.totalorder %s17, 0
      %p120 = por %p118, %p119
      %p121 = scmp.ne.s32.totalorder %s107, %s108
      %p122 = scmp.eq.s32.totalorder %s18, 3
      %p123 = por %p121, %p122
      %p125 = scmp.ne.s32.totalorder %s108, %s124
      %p126 = scmp.eq.s32.totalorder %s18, 0
      %p127 = por %p125, %p126
      %p128 = scmp.le.s32.totalorder 1, %s12
      %p129 = scmp.lt.s32.totalorder %s12, 5
      %p130 = pnand %p128, %p129
      %p131 = pneg %p130
      // Predicated region
      $region9: #{tpu_custom_call.1} parent=5 // pred_check
        _
      $region10: #{tpu_custom_call.1} parent=5 // pred_check_branch
        %133 = sbr.rel (%p130) target = $region12
      $region11: #{tpu_custom_call.1} parent=5 // pred_region
        %s134 = ssub.s32 %s12, 1
        // Predicated region
        $region13: #{tpu_custom_call.1} parent=11 // pred_check
          %p135 = pneg %p73
        $region14: #{tpu_custom_call.1} parent=11 // pred_check_branch
          %137 = sbr.rel (%p135) target = $region16
        $region15: #{tpu_custom_call.1} parent=11 // pred_region
          _
        $region16: #{tpu_custom_call.1} parent=11 // pred_fallthru
          _
        // Predicated region
        $region17: #{tpu_custom_call.1} parent=11 // pred_check
          %p138 = pneg %p94
        $region18: #{tpu_custom_call.1} parent=11 // pred_check_branch
          %140 = sbr.rel (%p138) target = $region20
        $region19: #{tpu_custom_call.1} parent=11 // pred_region
          _
        $region20: #{tpu_custom_call.1} parent=11 // pred_fallthru
          _
      $region12: #{tpu_custom_call.1} parent=5 // pred_fallthru
        _
      %p141 = scmp.lt.s32.totalorder %s12, 4
      // Predicated region
      $region21: #{tpu_custom_call.1} parent=5 // pred_check
        %p142 = pneg %p141
      $region22: #{tpu_custom_call.1} parent=5 // pred_check_branch
        %144 = sbr.rel (%p142) target = $region24
      $region23: #{tpu_custom_call.1} parent=5 // pred_region
        // Predicated region
        $region25: #{tpu_custom_call.1} parent=23 // pred_check
          %p145 = pneg %p46
        $region26: #{tpu_custom_call.1} parent=23 // pred_check_branch
          %147 = sbr.rel (%p145) target = $region28
        $region27: #{tpu_custom_call.1} parent=23 // pred_region
          %s148 = sand.u32 %s36, 1
          %s149 = scalar_lea.sflag [#allocation3], %s148
          %s150 = sand.u32 %s36, 1
          %s151 = smul.addr %s150, 128
          %s152 = scalar_lea.vmem [#allocation2], %s151
          %s154 = ssub.s32 2048, 2048
          %155 = vsyncadd %s149, %s154
          %s156 = smul.addr %s19, 32
          %s157 = sadd.s32 %s20, %s156
          %s158 = smul.addr %s157, 128
          %s159 = scalar_lea.hbm %s0, %s158
          %s160 = sshll.u32 %s152, 4
          %s161 = int_to_ptr.vmem [resolvable:$true] %s160
          %166 = dma.hbm_to_vmem [thread:$0]  %s159, 2048, %s161, %s149, 256, 128, 8
        $region28: #{tpu_custom_call.1} parent=23 // pred_fallthru
          _
      $region24: #{tpu_custom_call.1} parent=5 // pred_fallthru
        _
      %p167 = scmp.le.s32.totalorder 1, %s12
      %p168 = scmp.lt.s32.totalorder %s12, 5
      %p169 = pnand %p167, %p168
      %p170 = pneg %p169
      // Predicated region
      $region29: #{tpu_custom_call.1} parent=5 // pred_check
        _
      $region30: #{tpu_custom_call.1} parent=5 // pred_check_branch
        %172 = sbr.rel (%p169) target = $region32
      $region31: #{tpu_custom_call.1} parent=5 // pred_region
        %s173 = ssub.s32 %s12, 1
        %s174 = sand.u32 %s39, 1
        %s175 = scalar_lea.sflag [#allocation3], %s174
        %s176 = sand.u32 %s39, 1
        %s177 = smul.addr %s176, 128
        %s178 = scalar_lea.vmem [#allocation2], %s177
        // Predicated region
        $region33: #{tpu_custom_call.1} parent=31 // pred_check
          %p179 = pneg %p52
        $region34: #{tpu_custom_call.1} parent=31 // pred_check_branch
          %181 = sbr.rel (%p179) target = $region36
        $region35: #{tpu_custom_call.1} parent=31 // pred_region
          %182 = dma.done %s175, 2048
        $region36: #{tpu_custom_call.1} parent=31 // pred_fallthru
          _
        %s183 = sand.u32 %s39, 1
        %s184 = scalar_lea.sflag [#allocation3], %s183
        %s185 = sand.u32 %s39, 1
        %s186 = smul.addr %s185, 128
        %s187 = scalar_lea.vmem [#allocation2], %s186
        %p188 = pneg %p52
        %p189 = pneg %p49
        %p190 = pneg %p73
        %p191 = pneg %p70
        %p192 = pneg %p94
        %p193 = pneg %p91
        %p194 = pneg %p120
        %p195 = pneg %p117
        %p196 = scmp.lt.s32.totalorder %s21, 1
        %s197 = scalar_select %p196, %s21, 1
        %s198 = smul.addr %s197, 32
        %s199 = smul.addr %s198, 8
        %s200 = scalar_lea.vmem %s3, %s199
        %p201 = scmp.lt.s32.totalorder %s21, 1
        %s202 = scalar_select %p201, %s21, 1
        %s203 = smul.addr %s202, 32
        %s204 = smul.addr %s203, 8
        %s205 = scalar_lea.vmem %s3, %s204
        %p207 = scmp.eq.s32.totalorder %s22, 0
        // Predicated region
        $region37: #{tpu_custom_call.1} parent=31 // pred_check
          %p208 = pneg %p207
        $region38: #{tpu_custom_call.1} parent=31 // pred_check_branch
          %210 = sbr.rel (%p208) target = $region40
        $region39: #{tpu_custom_call.1} parent=31 // pred_region
          %vm211 = vcmask 7168
          %212 = vst.msk [vmem:[%s205] sm:$0xff] %vm211, 0.0
          %213 = vst.msk [vmem:[%s205 + $0x8] sm:$0xff] %vm211, 0.0
          %214 = vst.msk [vmem:[%s205 + $0x10] sm:$0xff] %vm211, 0.0
          %215 = vst.msk [vmem:[%s205 + $0x18] sm:$0xff] %vm211, 0.0
          %216 = vst.msk [vmem:[%s205 + $0x20] sm:$0xff] %vm211, 0.0
          %217 = vst.msk [vmem:[%s205 + $0x28] sm:$0xff] %vm211, 0.0
          %218 = vst.msk [vmem:[%s205 + $0x30] sm:$0xff] %vm211, 0.0
          %219 = vst.msk [vmem:[%s205 + $0x38] sm:$0xff] %vm211, 0.0
          %220 = vst.msk [vmem:[%s205 + $0x40] sm:$0xff] %vm211, 0.0
          %221 = vst.msk [vmem:[%s205 + $0x48] sm:$0xff] %vm211, 0.0
          %222 = vst.msk [vmem:[%s205 + $0x50] sm:$0xff] %vm211, 0.0
          %223 = vst.msk [vmem:[%s205 + $0x58] sm:$0xff] %vm211, 0.0
          %224 = vst.msk [vmem:[%s205 + $0x60] sm:$0xff] %vm211, 0.0
          %225 = vst.msk [vmem:[%s205 + $0x68] sm:$0xff] %vm211, 0.0
          %226 = vst.msk [vmem:[%s205 + $0x70] sm:$0xff] %vm211, 0.0
          %227 = vst.msk [vmem:[%s205 + $0x78] sm:$0xff] %vm211, 0.0
          %228 = vst.msk [vmem:[%s205 + $0x80] sm:$0xff] %vm211, 0.0
          %229 = vst.msk [vmem:[%s205 + $0x88] sm:$0xff] %vm211, 0.0
          %230 = vst.msk [vmem:[%s205 + $0x90] sm:$0xff] %vm211, 0.0
          %231 = vst.msk [vmem:[%s205 + $0x98] sm:$0xff] %vm211, 0.0
          %232 = vst.msk [vmem:[%s205 + $0xa0] sm:$0xff] %vm211, 0.0
          %233 = vst.msk [vmem:[%s205 + $0xa8] sm:$0xff] %vm211, 0.0
          %234 = vst.msk [vmem:[%s205 + $0xb0] sm:$0xff] %vm211, 0.0
          %235 = vst.msk [vmem:[%s205 + $0xb8] sm:$0xff] %vm211, 0.0
          %236 = vst.msk [vmem:[%s205 + $0xc0] sm:$0xff] %vm211, 0.0
          %237 = vst.msk [vmem:[%s205 + $0xc8] sm:$0xff] %vm211, 0.0
          %238 = vst.msk [vmem:[%s205 + $0xd0] sm:$0xff] %vm211, 0.0
          %239 = vst.msk [vmem:[%s205 + $0xd8] sm:$0xff] %vm211, 0.0
          %240 = vst.msk [vmem:[%s205 + $0xe0] sm:$0xff] %vm211, 0.0
          %241 = vst.msk [vmem:[%s205 + $0xe8] sm:$0xff] %vm211, 0.0
          %242 = vst.msk [vmem:[%s205 + $0xf0] sm:$0xff] %vm211, 0.0
          %243 = vst.msk [vmem:[%s205 + $0xf8] sm:$0xff] %vm211, 0.0
        $region40: #{tpu_custom_call.1} parent=31 // pred_fallthru
          _
        %v244 = vld [vmem:[%s178] sm:$0xff]
        %v245 = vld [vmem:[%s178 + $0x8] sm:$0xff]
        %v246 = vld [vmem:[%s178 + $0x10] sm:$0xff]
        %v247 = vld [vmem:[%s178 + $0x18] sm:$0xff]
        %v248 = vld [vmem:[%s178 + $0x20] sm:$0xff]
        %v249 = vld [vmem:[%s178 + $0x28] sm:$0xff]
        %v250 = vld [vmem:[%s178 + $0x30] sm:$0xff]
        %v251 = vld [vmem:[%s178 + $0x38] sm:$0xff]
        %v252 = vld [vmem:[%s178 + $0x40] sm:$0xff]
        %v253 = vld [vmem:[%s178 + $0x48] sm:$0xff]
        %v254 = vld [vmem:[%s178 + $0x50] sm:$0xff]
        %v255 = vld [vmem:[%s178 + $0x58] sm:$0xff]
        %v256 = vld [vmem:[%s178 + $0x60] sm:$0xff]
        %v257 = vld [vmem:[%s178 + $0x68] sm:$0xff]
        %v258 = vld [vmem:[%s178 + $0x70] sm:$0xff]
        %v259 = vld [vmem:[%s178 + $0x78] sm:$0xff]
        %v260 = vpack.c.bf16 %v245, %v244
        %v261 = vpack.c.bf16 %v247, %v246
        %v262 = vpack.c.bf16 %v249, %v248
        %v263 = vpack.c.bf16 %v251, %v250
        %v264 = vpack.c.bf16 %v253, %v252
        %v265 = vpack.c.bf16 %v255, %v254
        %v266 = vpack.c.bf16 %v257, %v256
        %v267 = vpack.c.bf16 %v259, %v258
        %v268 = vld [vmem:[%s1] sm:$0xf]
        %v269 = vld [vmem:[%s1 + $0x4] sm:$0xf]
        %v270 = vld [vmem:[%s1 + $0x8] sm:$0xf]
        %v271 = vld [vmem:[%s1 + $0xc] sm:$0xf]
        %v272 = vld [vmem:[%s1 + $0x10] sm:$0xf]
        %v273 = vld [vmem:[%s1 + $0x14] sm:$0xf]
        %v274 = vld [vmem:[%s1 + $0x18] sm:$0xf]
        %v275 = vld [vmem:[%s1 + $0x1c] sm:$0xf]
        %v276 = vld [vmem:[%s1 + $0x20] sm:$0xf]
        %v277 = vld [vmem:[%s1 + $0x24] sm:$0xf]
        %v278 = vld [vmem:[%s1 + $0x28] sm:$0xf]
        %v279 = vld [vmem:[%s1 + $0x2c] sm:$0xf]
        %v280 = vld [vmem:[%s1 + $0x30] sm:$0xf]
        %v281 = vld [vmem:[%s1 + $0x34] sm:$0xf]
        %v282 = vld [vmem:[%s1 + $0x38] sm:$0xf]
        %v283 = vld [vmem:[%s1 + $0x3c] sm:$0xf]
        %v284 = vld [vmem:[%s1 + $0x40] sm:$0xf]
        %v285 = vld [vmem:[%s1 + $0x44] sm:$0xf]
        %v286 = vld [vmem:[%s1 + $0x48] sm:$0xf]
        %v287 = vld [vmem:[%s1 + $0x4c] sm:$0xf]
        %v288 = vld [vmem:[%s1 + $0x50] sm:$0xf]
        %v289 = vld [vmem:[%s1 + $0x54] sm:$0xf]
        %v290 = vld [vmem:[%s1 + $0x58] sm:$0xf]
        %v291 = vld [vmem:[%s1 + $0x5c] sm:$0xf]
        %v292 = vld [vmem:[%s1 + $0x60] sm:$0xf]
        %v293 = vld [vmem:[%s1 + $0x64] sm:$0xf]
        %v294 = vld [vmem:[%s1 + $0x68] sm:$0xf]
        %v295 = vld [vmem:[%s1 + $0x6c] sm:$0xf]
        %v296 = vld [vmem:[%s1 + $0x70] sm:$0xf]
        %v297 = vld [vmem:[%s1 + $0x74] sm:$0xf]
        %v298 = vld [vmem:[%s1 + $0x78] sm:$0xf]
        %v299 = vld [vmem:[%s1 + $0x7c] sm:$0xf]
        %v300 = vld [vmem:[%s2] sm:$0xff]
        %v301 = vld [vmem:[%s2 + $0x8] sm:$0xff]
        %v302 = vld [vmem:[%s2 + $0x10] sm:$0xff]
        %v303 = vld [vmem:[%s2 + $0x18] sm:$0xff]
        %v304 = vld [vmem:[%s2 + $0x20] sm:$0xff]
        %v305 = vld [vmem:[%s2 + $0x28] sm:$0xff]
        %v306 = vld [vmem:[%s2 + $0x30] sm:$0xff]
        %v307 = vld [vmem:[%s2 + $0x38] sm:$0xff]
        %v308 = vld [vmem:[%s2 + $0x40] sm:$0xff]
        %v309 = vld [vmem:[%s2 + $0x48] sm:$0xff]
        %v310 = vld [vmem:[%s2 + $0x50] sm:$0xff]
        %v311 = vld [vmem:[%s2 + $0x58] sm:$0xff]
        %v312 = vld [vmem:[%s2 + $0x60] sm:$0xff]
        %v313 = vld [vmem:[%s2 + $0x68] sm:$0xff]
        %v314 = vld [vmem:[%s2 + $0x70] sm:$0xff]
        %v315 = vld [vmem:[%s2 + $0x78] sm:$0xff]
        %v316 = vld [vmem:[%s2 + $0x80] sm:$0xff]
        %v317 = vld [vmem:[%s2 + $0x88] sm:$0xff]
        %v318 = vld [vmem:[%s2 + $0x90] sm:$0xff]
        %v319 = vld [vmem:[%s2 + $0x98] sm:$0xff]
        %v320 = vld [vmem:[%s2 + $0xa0] sm:$0xff]
        %v321 = vld [vmem:[%s2 + $0xa8] sm:$0xff]
        %v322 = vld [vmem:[%s2 + $0xb0] sm:$0xff]
        %v323 = vld [vmem:[%s2 + $0xb8] sm:$0xff]
        %v324 = vld [vmem:[%s2 + $0xc0] sm:$0xff]
        %v325 = vld [vmem:[%s2 + $0xc8] sm:$0xff]
        %v326 = vld [vmem:[%s2 + $0xd0] sm:$0xff]
        %v327 = vld [vmem:[%s2 + $0xd8] sm:$0xff]
        %v328 = vld [vmem:[%s2 + $0xe0] sm:$0xff]
        %v329 = vld [vmem:[%s2 + $0xe8] sm:$0xff]
        %v330 = vld [vmem:[%s2 + $0xf0] sm:$0xff]
        %v331 = vld [vmem:[%s2 + $0xf8] sm:$0xff]
        %333 = vset.pattern.permute.xlu0 0
        %334 = vperm.xlu0 %333, %v300
        %v335 = vpop.permute.xlu0 %334
        %338 = vset.pattern.permute.xlu0 0
        %339 = vperm.xlu0 %338, %v301
        %v340 = vpop.permute.xlu0 %339
        %343 = vset.pattern.permute.xlu0 0
        %344 = vperm.xlu0 %343, %v302
        %v345 = vpop.permute.xlu0 %344
        %348 = vset.pattern.permute.xlu0 0
        %349 = vperm.xlu0 %348, %v303
        %v350 = vpop.permute.xlu0 %349
        %353 = vset.pattern.permute.xlu0 0
        %354 = vperm.xlu0 %353, %v304
        %v355 = vpop.permute.xlu0 %354
        %358 = vset.pattern.permute.xlu0 0
        %359 = vperm.xlu0 %358, %v305
        %v360 = vpop.permute.xlu0 %359
        %363 = vset.pattern.permute.xlu0 0
        %364 = vperm.xlu0 %363, %v306
        %v365 = vpop.permute.xlu0 %364
        %368 = vset.pattern.permute.xlu0 0
        %369 = vperm.xlu0 %368, %v307
        %v370 = vpop.permute.xlu0 %369
        %373 = vset.pattern.permute.xlu0 0
        %374 = vperm.xlu0 %373, %v308
        %v375 = vpop.permute.xlu0 %374
        %378 = vset.pattern.permute.xlu0 0
        %379 = vperm.xlu0 %378, %v309
        %v380 = vpop.permute.xlu0 %379
        %383 = vset.pattern.permute.xlu0 0
        %384 = vperm.xlu0 %383, %v310
        %v385 = vpop.permute.xlu0 %384
        %388 = vset.pattern.permute.xlu0 0
        %389 = vperm.xlu0 %388, %v311
        %v390 = vpop.permute.xlu0 %389
        %393 = vset.pattern.permute.xlu0 0
        %394 = vperm.xlu0 %393, %v312
        %v395 = vpop.permute.xlu0 %394
        %398 = vset.pattern.permute.xlu0 0
        %399 = vperm.xlu0 %398, %v313
        %v400 = vpop.permute.xlu0 %399
        %403 = vset.pattern.permute.xlu0 0
        %404 = vperm.xlu0 %403, %v314
        %v405 = vpop.permute.xlu0 %404
        %408 = vset.pattern.permute.xlu0 0
        %409 = vperm.xlu0 %408, %v315
        %v410 = vpop.permute.xlu0 %409
        %413 = vset.pattern.permute.xlu0 0
        %414 = vperm.xlu0 %413, %v316
        %v415 = vpop.permute.xlu0 %414
        %418 = vset.pattern.permute.xlu0 0
        %419 = vperm.xlu0 %418, %v317
        %v420 = vpop.permute.xlu0 %419
        %423 = vset.pattern.permute.xlu0 0
        %424 = vperm.xlu0 %423, %v318
        %v425 = vpop.permute.xlu0 %424
        %428 = vset.pattern.permute.xlu0 0
        %429 = vperm.xlu0 %428, %v319
        %v430 = vpop.permute.xlu0 %429
        %433 = vset.pattern.permute.xlu0 0
        %434 = vperm.xlu0 %433, %v320
        %v435 = vpop.permute.xlu0 %434
        %438 = vset.pattern.permute.xlu0 0
        %439 = vperm.xlu0 %438, %v321
        %v440 = vpop.permute.xlu0 %439
        %443 = vset.pattern.permute.xlu0 0
        %444 = vperm.xlu0 %443, %v322
        %v445 = vpop.permute.xlu0 %444
        %448 = vset.pattern.permute.xlu0 0
        %449 = vperm.xlu0 %448, %v323
        %v450 = vpop.permute.xlu0 %449
        %453 = vset.pattern.permute.xlu0 0
        %454 = vperm.xlu0 %453, %v324
        %v455 = vpop.permute.xlu0 %454
        %458 = vset.pattern.permute.xlu0 0
        %459 = vperm.xlu0 %458, %v325
        %v460 = vpop.permute.xlu0 %459
        %463 = vset.pattern.permute.xlu0 0
        %464 = vperm.xlu0 %463, %v326
        %v465 = vpop.permute.xlu0 %464
        %468 = vset.pattern.permute.xlu0 0
        %469 = vperm.xlu0 %468, %v327
        %v470 = vpop.permute.xlu0 %469
        %473 = vset.pattern.permute.xlu0 0
        %474 = vperm.xlu0 %473, %v328
        %v475 = vpop.permute.xlu0 %474
        %478 = vset.pattern.permute.xlu0 0
        %479 = vperm.xlu0 %478, %v329
        %v480 = vpop.permute.xlu0 %479
        %483 = vset.pattern.permute.xlu0 0
        %484 = vperm.xlu0 %483, %v330
        %v485 = vpop.permute.xlu0 %484
        %488 = vset.pattern.permute.xlu0 0
        %489 = vperm.xlu0 %488, %v331
        %v490 = vpop.permute.xlu0 %489
        %v524 = vunpack.c.l.b16 %v268
        %v525 = vunpack.c.l.b16 %v269
        %v526 = vunpack.c.l.b16 %v270
        %v527 = vunpack.c.l.b16 %v271
        %v528 = vunpack.c.l.b16 %v272
        %v529 = vunpack.c.l.b16 %v273
        %v530 = vunpack.c.l.b16 %v274
        %v531 = vunpack.c.l.b16 %v275
        %v532 = vunpack.c.l.b16 %v276
        %v533 = vunpack.c.l.b16 %v277
        %v534 = vunpack.c.l.b16 %v278
        %v535 = vunpack.c.l.b16 %v279
        %v536 = vunpack.c.l.b16 %v280
        %v537 = vunpack.c.l.b16 %v281
        %v538 = vunpack.c.l.b16 %v282
        %v539 = vunpack.c.l.b16 %v283
        %v540 = vunpack.c.l.b16 %v284
        %v541 = vunpack.c.l.b16 %v285
        %v542 = vunpack.c.l.b16 %v286
        %v543 = vunpack.c.l.b16 %v287
        %v544 = vunpack.c.l.b16 %v288
        %v545 = vunpack.c.l.b16 %v289
        %v546 = vunpack.c.l.b16 %v290
        %v547 = vunpack.c.l.b16 %v291
        %v548 = vunpack.c.l.b16 %v292
        %v549 = vunpack.c.l.b16 %v293
        %v550 = vunpack.c.l.b16 %v294
        %v551 = vunpack.c.l.b16 %v295
        %v552 = vunpack.c.l.b16 %v296
        %v553 = vunpack.c.l.b16 %v297
        %v554 = vunpack.c.l.b16 %v298
        %v555 = vunpack.c.l.b16 %v299
        %v556 = vpack.c.b16 %v525, %v524
        %v557 = vpack.c.b16 %v527, %v526
        %v558 = vpack.c.b16 %v529, %v528
        %v559 = vpack.c.b16 %v531, %v530
        %v560 = vpack.c.b16 %v533, %v532
        %v561 = vpack.c.b16 %v535, %v534
        %v562 = vpack.c.b16 %v537, %v536
        %v563 = vpack.c.b16 %v539, %v538
        %v564 = vpack.c.b16 %v541, %v540
        %v565 = vpack.c.b16 %v543, %v542
        %v566 = vpack.c.b16 %v545, %v544
        %v567 = vpack.c.b16 %v547, %v546
        %v568 = vpack.c.b16 %v549, %v548
        %v569 = vpack.c.b16 %v551, %v550
        %v570 = vpack.c.b16 %v553, %v552
        %v571 = vpack.c.b16 %v555, %v554
        %588 = vmatprep.subr.bf16.mxu0 0
        %589 = vmatpush1.bf16.msra.mxu0 %v267
        %590 = vmatprep.subr.bf16.mxu0 0
        %591 = vmatpush1.bf16.msra.mxu0 %v266
        %592 = vmatprep.subr.bf16.mxu0 0
        %593 = vmatpush1.bf16.msra.mxu0 %v265
        %594 = vmatprep.subr.bf16.mxu0 0
        %595 = vmatpush1.bf16.msra.mxu0 %v264
        %596 = vmatprep.subr.bf16.mxu0 0
        %597 = vmatpush1.bf16.msra.mxu0 %v263
        %598 = vmatprep.subr.bf16.mxu0 0
        %599 = vmatpush1.bf16.msra.mxu0 %v262
        %600 = vmatprep.subr.bf16.mxu0 0
        %601 = vmatpush1.bf16.msra.mxu0 %v261
        %602 = vmatprep.subr.bf16.mxu0 0
        %603 = vmatpush1.bf16.msra.mxu0 %v260
        %604 = vmatprep.subr.bf16.mxu0 0
        %605 = vmatpush2.bf16.msra.mxu0 0
        %606 = vmatprep.subr.bf16.mxu0 0
        %607 = vmatpush2.bf16.msra.mxu0 0
        %608 = vmatprep.subr.bf16.mxu0 0
        %609 = vmatpush2.bf16.msra.mxu0 0
        %610 = vmatprep.subr.bf16.mxu0 0
        %611 = vmatpush2.bf16.msra.mxu0 0
        %612 = vmatprep.subr.bf16.mxu0 0
        %613 = vmatpush2.bf16.msra.mxu0 0
        %614 = vmatprep.subr.bf16.mxu0 0
        %615 = vmatpush2.bf16.msra.mxu0 0
        %616 = vmatprep.subr.bf16.mxu0 0
        %617 = vmatpush2.bf16.msra.mxu0 0
        %618 = vmatprep.subr.bf16.mxu0 0
        %619 = vmatpush2.bf16.msra.mxu0 0
        %620 = vmatprep.mubr.bf16.mxu0 0
        %621 = vmatmul.mubr.bf16.gmra.mxu0 %v556
        %v622 = vpop.f32.mrf.mxu0
        %v623 = vadd.f32 %v335, %v622
        %v624 = vpop.f32.mrf.mxu0
        %v625 = vpop.f32.mrf.mxu0
        %v626 = vadd.f32 %v340, %v625
        %v627 = vpop.f32.mrf.mxu0
        %628 = vmatprep.mubr.bf16.mxu0 0
        %629 = vmatmul.mubr.bf16.gmra.mxu0 %v557
        %v630 = vpop.f32.mrf.mxu0
        %v631 = vadd.f32 %v345, %v630
        %v632 = vpop.f32.mrf.mxu0
        %v633 = vpop.f32.mrf.mxu0
        %v634 = vadd.f32 %v350, %v633
        %v635 = vpop.f32.mrf.mxu0
        %636 = vmatprep.mubr.bf16.mxu0 0
        %637 = vmatmul.mubr.bf16.gmra.mxu0 %v558
        %v638 = vpop.f32.mrf.mxu0
        %v639 = vadd.f32 %v355, %v638
        %v640 = vpop.f32.mrf.mxu0
        %v641 = vpop.f32.mrf.mxu0
        %v642 = vadd.f32 %v360, %v641
        %v643 = vpop.f32.mrf.mxu0
        %644 = vmatprep.mubr.bf16.mxu0 0
        %645 = vmatmul.mubr.bf16.gmra.mxu0 %v559
        %v646 = vpop.f32.mrf.mxu0
        %v647 = vadd.f32 %v365, %v646
        %v648 = vpop.f32.mrf.mxu0
        %v649 = vpop.f32.mrf.mxu0
        %v650 = vadd.f32 %v370, %v649
        %v651 = vpop.f32.mrf.mxu0
        %652 = vmatprep.mubr.bf16.mxu0 0
        %653 = vmatmul.mubr.bf16.gmra.mxu0 %v560
        %v654 = vpop.f32.mrf.mxu0
        %v655 = vadd.f32 %v375, %v654
        %v656 = vpop.f32.mrf.mxu0
        %v657 = vpop.f32.mrf.mxu0
        %v658 = vadd.f32 %v380, %v657
        %v659 = vpop.f32.mrf.mxu0
        %660 = vmatprep.mubr.bf16.mxu0 0
        %661 = vmatmul.mubr.bf16.gmra.mxu0 %v561
        %v662 = vpop.f32.mrf.mxu0
        %v663 = vadd.f32 %v385, %v662
        %v664 = vpop.f32.mrf.mxu0
        %v665 = vpop.f32.mrf.mxu0
        %v666 = vadd.f32 %v390, %v665
        %v667 = vpop.f32.mrf.mxu0
        %668 = vmatprep.mubr.bf16.mxu0 0
        %669 = vmatmul.mubr.bf16.gmra.mxu0 %v562
        %v670 = vpop.f32.mrf.mxu0
        %v671 = vadd.f32 %v395, %v670
        %v672 = vpop.f32.mrf.mxu0
        %v673 = vpop.f32.mrf.mxu0
        %v674 = vadd.f32 %v400, %v673
        %v675 = vpop.f32.mrf.mxu0
        %676 = vmatprep.mubr.bf16.mxu0 0
        %677 = vmatmul.mubr.bf16.gmra.mxu0 %v563
        %v678 = vpop.f32.mrf.mxu0
        %v679 = vadd.f32 %v405, %v678
        %v680 = vpop.f32.mrf.mxu0
        %v681 = vpop.f32.mrf.mxu0
        %v682 = vadd.f32 %v410, %v681
        %v683 = vpop.f32.mrf.mxu0
        %684 = vmatprep.mubr.bf16.mxu0 0
        %685 = vmatmul.mubr.bf16.gmra.mxu0 %v564
        %v686 = vpop.f32.mrf.mxu0
        %v687 = vadd.f32 %v415, %v686
        %v688 = vpop.f32.mrf.mxu0
        %v689 = vpop.f32.mrf.mxu0
        %v690 = vadd.f32 %v420, %v689
        %v691 = vpop.f32.mrf.mxu0
        %692 = vmatprep.mubr.bf16.mxu0 0
        %693 = vmatmul.mubr.bf16.gmra.mxu0 %v565
        %v694 = vpop.f32.mrf.mxu0
        %v695 = vadd.f32 %v425, %v694
        %v696 = vpop.f32.mrf.mxu0
        %v697 = vpop.f32.mrf.mxu0
        %v698 = vadd.f32 %v430, %v697
        %v699 = vpop.f32.mrf.mxu0
        %700 = vmatprep.mubr.bf16.mxu0 0
        %701 = vmatmul.mubr.bf16.gmra.mxu0 %v566
        %v702 = vpop.f32.mrf.mxu0
        %v703 = vadd.f32 %v435, %v702
        %v704 = vpop.f32.mrf.mxu0
        %v705 = vpop.f32.mrf.mxu0
        %v706 = vadd.f32 %v440, %v705
        %v707 = vpop.f32.mrf.mxu0
        %708 = vmatprep.mubr.bf16.mxu0 0
        %709 = vmatmul.mubr.bf16.gmra.mxu0 %v567
        %v710 = vpop.f32.mrf.mxu0
        %v711 = vadd.f32 %v445, %v710
        %v712 = vpop.f32.mrf.mxu0
        %v713 = vpop.f32.mrf.mxu0
        %v714 = vadd.f32 %v450, %v713
        %v715 = vpop.f32.mrf.mxu0
        %716 = vmatprep.mubr.bf16.mxu0 0
        %717 = vmatmul.mubr.bf16.gmra.mxu0 %v568
        %v718 = vpop.f32.mrf.mxu0
        %v719 = vadd.f32 %v455, %v718
        %v720 = vpop.f32.mrf.mxu0
        %v721 = vpop.f32.mrf.mxu0
        %v722 = vadd.f32 %v460, %v721
        %v723 = vpop.f32.mrf.mxu0
        %724 = vmatprep.mubr.bf16.mxu0 0
        %725 = vmatmul.mubr.bf16.gmra.mxu0 %v569
        %v726 = vpop.f32.mrf.mxu0
        %v727 = vadd.f32 %v465, %v726
        %v728 = vpop.f32.mrf.mxu0
        %v729 = vpop.f32.mrf.mxu0
        %v730 = vadd.f32 %v470, %v729
        %v731 = vpop.f32.mrf.mxu0
        %732 = vmatprep.mubr.bf16.mxu0 0
        %733 = vmatmul.mubr.bf16.gmra.mxu0 %v570
        %v734 = vpop.f32.mrf.mxu0
        %v735 = vadd.f32 %v475, %v734
        %v736 = vpop.f32.mrf.mxu0
        %v737 = vpop.f32.mrf.mxu0
        %v738 = vadd.f32 %v480, %v737
        %v739 = vpop.f32.mrf.mxu0
        %740 = vmatprep.mubr.bf16.mxu0 0
        %741 = vmatmul.mubr.bf16.gmra.mxu0 %v571
        %v742 = vpop.f32.mrf.mxu0
        %v743 = vadd.f32 %v485, %v742
        %v744 = vpop.f32.mrf.mxu0
        %v745 = vpop.f32.mrf.mxu0
        %v746 = vadd.f32 %v490, %v745
        %v747 = vpop.f32.mrf.mxu0
        %748 = vdwg.mxu0
        %v749 = vmax.f32 %v623, 0.0
        %v750 = vmax.f32 %v626, 0.0
        %v751 = vmax.f32 %v631, 0.0
        %v752 = vmax.f32 %v634, 0.0
        %v753 = vmax.f32 %v639, 0.0
        %v754 = vmax.f32 %v642, 0.0
        %v755 = vmax.f32 %v647, 0.0
        %v756 = vmax.f32 %v650, 0.0
        %v757 = vmax.f32 %v655, 0.0
        %v758 = vmax.f32 %v658, 0.0
        %v759 = vmax.f32 %v663, 0.0
        %v760 = vmax.f32 %v666, 0.0
        %v761 = vmax.f32 %v671, 0.0
        %v762 = vmax.f32 %v674, 0.0
        %v763 = vmax.f32 %v679, 0.0
        %v764 = vmax.f32 %v682, 0.0
        %v765 = vmax.f32 %v687, 0.0
        %v766 = vmax.f32 %v690, 0.0
        %v767 = vmax.f32 %v695, 0.0
        %v768 = vmax.f32 %v698, 0.0
        %v769 = vmax.f32 %v703, 0.0
        %v770 = vmax.f32 %v706, 0.0
        %v771 = vmax.f32 %v711, 0.0
        %v772 = vmax.f32 %v714, 0.0
        %v773 = vmax.f32 %v719, 0.0
        %v774 = vmax.f32 %v722, 0.0
        %v775 = vmax.f32 %v727, 0.0
        %v776 = vmax.f32 %v730, 0.0
        %v777 = vmax.f32 %v735, 0.0
        %v778 = vmax.f32 %v738, 0.0
        %v779 = vmax.f32 %v743, 0.0
        %v780 = vmax.f32 %v746, 0.0
        %v781 = vld [vmem:[%s205] sm:$0xff]
        %v782 = vld [vmem:[%s205 + $0x8] sm:$0xff]
        %v783 = vld [vmem:[%s205 + $0x10] sm:$0xff]
        %v784 = vld [vmem:[%s205 + $0x18] sm:$0xff]
        %v785 = vld [vmem:[%s205 + $0x20] sm:$0xff]
        %v786 = vld [vmem:[%s205 + $0x28] sm:$0xff]
        %v787 = vld [vmem:[%s205 + $0x30] sm:$0xff]
        %v788 = vld [vmem:[%s205 + $0x38] sm:$0xff]
        %v789 = vld [vmem:[%s205 + $0x40] sm:$0xff]
        %v790 = vld [vmem:[%s205 + $0x48] sm:$0xff]
        %v791 = vld [vmem:[%s205 + $0x50] sm:$0xff]
        %v792 = vld [vmem:[%s205 + $0x58] sm:$0xff]
        %v793 = vld [vmem:[%s205 + $0x60] sm:$0xff]
        %v794 = vld [vmem:[%s205 + $0x68] sm:$0xff]
        %v795 = vld [vmem:[%s205 + $0x70] sm:$0xff]
        %v796 = vld [vmem:[%s205 + $0x78] sm:$0xff]
        %v797 = vld [vmem:[%s205 + $0x80] sm:$0xff]
        %v798 = vld [vmem:[%s205 + $0x88] sm:$0xff]
        %v799 = vld [vmem:[%s205 + $0x90] sm:$0xff]
        %v800 = vld [vmem:[%s205 + $0x98] sm:$0xff]
        %v801 = vld [vmem:[%s205 + $0xa0] sm:$0xff]
        %v802 = vld [vmem:[%s205 + $0xa8] sm:$0xff]
        %v803 = vld [vmem:[%s205 + $0xb0] sm:$0xff]
        %v804 = vld [vmem:[%s205 + $0xb8] sm:$0xff]
        %v805 = vld [vmem:[%s205 + $0xc0] sm:$0xff]
        %v806 = vld [vmem:[%s205 + $0xc8] sm:$0xff]
        %v807 = vld [vmem:[%s205 + $0xd0] sm:$0xff]
        %v808 = vld [vmem:[%s205 + $0xd8] sm:$0xff]
        %v809 = vld [vmem:[%s205 + $0xe0] sm:$0xff]
        %v810 = vld [vmem:[%s205 + $0xe8] sm:$0xff]
        %v811 = vld [vmem:[%s205 + $0xf0] sm:$0xff]
        %v812 = vld [vmem:[%s205 + $0xf8] sm:$0xff]
        %813 = vadd.xlane.f32.xlu0 %v749
        %v814 = vpop.xlane.xlu0 %813
        %815 = vadd.xlane.f32.xlu0 %v750
        %v816 = vpop.xlane.xlu0 %815
        %817 = vadd.xlane.f32.xlu0 %v751
        %v818 = vpop.xlane.xlu0 %817
        %819 = vadd.xlane.f32.xlu0 %v752
        %v820 = vpop.xlane.xlu0 %819
        %821 = vadd.xlane.f32.xlu0 %v753
        %v822 = vpop.xlane.xlu0 %821
        %823 = vadd.xlane.f32.xlu0 %v754
        %v824 = vpop.xlane.xlu0 %823
        %825 = vadd.xlane.f32.xlu0 %v755
        %v826 = vpop.xlane.xlu0 %825
        %827 = vadd.xlane.f32.xlu0 %v756
        %v828 = vpop.xlane.xlu0 %827
        %829 = vadd.xlane.f32.xlu0 %v757
        %v830 = vpop.xlane.xlu0 %829
        %831 = vadd.xlane.f32.xlu0 %v758
        %v832 = vpop.xlane.xlu0 %831
        %833 = vadd.xlane.f32.xlu0 %v759
        %v834 = vpop.xlane.xlu0 %833
        %835 = vadd.xlane.f32.xlu0 %v760
        %v836 = vpop.xlane.xlu0 %835
        %837 = vadd.xlane.f32.xlu0 %v761
        %v838 = vpop.xlane.xlu0 %837
        %839 = vadd.xlane.f32.xlu0 %v762
        %v840 = vpop.xlane.xlu0 %839
        %841 = vadd.xlane.f32.xlu0 %v763
        %v842 = vpop.xlane.xlu0 %841
        %843 = vadd.xlane.f32.xlu0 %v764
        %v844 = vpop.xlane.xlu0 %843
        %845 = vadd.xlane.f32.xlu0 %v765
        %v846 = vpop.xlane.xlu0 %845
        %847 = vadd.xlane.f32.xlu0 %v766
        %v848 = vpop.xlane.xlu0 %847
        %849 = vadd.xlane.f32.xlu0 %v767
        %v850 = vpop.xlane.xlu0 %849
        %851 = vadd.xlane.f32.xlu0 %v768
        %v852 = vpop.xlane.xlu0 %851
        %853 = vadd.xlane.f32.xlu0 %v769
        %v854 = vpop.xlane.xlu0 %853
        %855 = vadd.xlane.f32.xlu0 %v770
        %v856 = vpop.xlane.xlu0 %855
        %857 = vadd.xlane.f32.xlu0 %v771
        %v858 = vpop.xlane.xlu0 %857
        %859 = vadd.xlane.f32.xlu0 %v772
        %v860 = vpop.xlane.xlu0 %859
        %861 = vadd.xlane.f32.xlu0 %v773
        %v862 = vpop.xlane.xlu0 %861
        %863 = vadd.xlane.f32.xlu0 %v774
        %v864 = vpop.xlane.xlu0 %863
        %865 = vadd.xlane.f32.xlu0 %v775
        %v866 = vpop.xlane.xlu0 %865
        %867 = vadd.xlane.f32.xlu0 %v776
        %v868 = vpop.xlane.xlu0 %867
        %869 = vadd.xlane.f32.xlu0 %v777
        %v870 = vpop.xlane.xlu0 %869
        %871 = vadd.xlane.f32.xlu0 %v778
        %v872 = vpop.xlane.xlu0 %871
        %873 = vadd.xlane.f32.xlu0 %v779
        %v874 = vpop.xlane.xlu0 %873
        %875 = vadd.xlane.f32.xlu0 %v780
        %v876 = vpop.xlane.xlu0 %875
        %v877 = vadd.f32 %v781, %v814
        %v878 = vadd.f32 %v782, %v816
        %v879 = vadd.f32 %v783, %v818
        %v880 = vadd.f32 %v784, %v820
        %v881 = vadd.f32 %v785, %v822
        %v882 = vadd.f32 %v786, %v824
        %v883 = vadd.f32 %v787, %v826
        %v884 = vadd.f32 %v788, %v828
        %v885 = vadd.f32 %v789, %v830
        %v886 = vadd.f32 %v790, %v832
        %v887 = vadd.f32 %v791, %v834
        %v888 = vadd.f32 %v792, %v836
        %v889 = vadd.f32 %v793, %v838
        %v890 = vadd.f32 %v794, %v840
        %v891 = vadd.f32 %v795, %v842
        %v892 = vadd.f32 %v796, %v844
        %v893 = vadd.f32 %v797, %v846
        %v894 = vadd.f32 %v798, %v848
        %v895 = vadd.f32 %v799, %v850
        %v896 = vadd.f32 %v800, %v852
        %v897 = vadd.f32 %v801, %v854
        %v898 = vadd.f32 %v802, %v856
        %v899 = vadd.f32 %v803, %v858
        %v900 = vadd.f32 %v804, %v860
        %v901 = vadd.f32 %v805, %v862
        %v902 = vadd.f32 %v806, %v864
        %v903 = vadd.f32 %v807, %v866
        %v904 = vadd.f32 %v808, %v868
        %v905 = vadd.f32 %v809, %v870
        %v906 = vadd.f32 %v810, %v872
        %v907 = vadd.f32 %v811, %v874
        %v908 = vadd.f32 %v812, %v876
        %vm909 = vcmask 7168
        %910 = vst.msk [vmem:[%s205] sm:$0xff] %vm909, %v877
        %911 = vst.msk [vmem:[%s205 + $0x8] sm:$0xff] %vm909, %v878
        %912 = vst.msk [vmem:[%s205 + $0x10] sm:$0xff] %vm909, %v879
        %913 = vst.msk [vmem:[%s205 + $0x18] sm:$0xff] %vm909, %v880
        %914 = vst.msk [vmem:[%s205 + $0x20] sm:$0xff] %vm909, %v881
        %915 = vst.msk [vmem:[%s205 + $0x28] sm:$0xff] %vm909, %v882
        %916 = vst.msk [vmem:[%s205 + $0x30] sm:$0xff] %vm909, %v883
        %917 = vst.msk [vmem:[%s205 + $0x38] sm:$0xff] %vm909, %v884
        %918 = vst.msk [vmem:[%s205 + $0x40] sm:$0xff] %vm909, %v885
        %919 = vst.msk [vmem:[%s205 + $0x48] sm:$0xff] %vm909, %v886
        %920 = vst.msk [vmem:[%s205 + $0x50] sm:$0xff] %vm909, %v887
        %921 = vst.msk [vmem:[%s205 + $0x58] sm:$0xff] %vm909, %v888
        %922 = vst.msk [vmem:[%s205 + $0x60] sm:$0xff] %vm909, %v889
        %923 = vst.msk [vmem:[%s205 + $0x68] sm:$0xff] %vm909, %v890
        %924 = vst.msk [vmem:[%s205 + $0x70] sm:$0xff] %vm909, %v891
        %925 = vst.msk [vmem:[%s205 + $0x78] sm:$0xff] %vm909, %v892
        %926 = vst.msk [vmem:[%s205 + $0x80] sm:$0xff] %vm909, %v893
        %927 = vst.msk [vmem:[%s205 + $0x88] sm:$0xff] %vm909, %v894
        %928 = vst.msk [vmem:[%s205 + $0x90] sm:$0xff] %vm909, %v895
        %929 = vst.msk [vmem:[%s205 + $0x98] sm:$0xff] %vm909, %v896
        %930 = vst.msk [vmem:[%s205 + $0xa0] sm:$0xff] %vm909, %v897
        %931 = vst.msk [vmem:[%s205 + $0xa8] sm:$0xff] %vm909, %v898
        %932 = vst.msk [vmem:[%s205 + $0xb0] sm:$0xff] %vm909, %v899
        %933 = vst.msk [vmem:[%s205 + $0xb8] sm:$0xff] %vm909, %v900
        %934 = vst.msk [vmem:[%s205 + $0xc0] sm:$0xff] %vm909, %v901
        %935 = vst.msk [vmem:[%s205 + $0xc8] sm:$0xff] %vm909, %v902
        %936 = vst.msk [vmem:[%s205 + $0xd0] sm:$0xff] %vm909, %v903
        %937 = vst.msk [vmem:[%s205 + $0xd8] sm:$0xff] %vm909, %v904
        %938 = vst.msk [vmem:[%s205 + $0xe0] sm:$0xff] %vm909, %v905
        %939 = vst.msk [vmem:[%s205 + $0xe8] sm:$0xff] %vm909, %v906
        %940 = vst.msk [vmem:[%s205 + $0xf0] sm:$0xff] %vm909, %v907
        %941 = vst.msk [vmem:[%s205 + $0xf8] sm:$0xff] %vm909, %v908
        %p942 = scmp.lt.s32.totalorder %s21, 1
        %s943 = scalar_select %p942, %s21, 1
        %s944 = smul.addr %s943, 32
        %s945 = smul.addr %s944, 8
        %s946 = scalar_lea.vmem %s3, %s945
        // Predicated region
        $region41: #{tpu_custom_call.1} parent=31 // pred_check
          %p947 = pneg %p117
        $region42: #{tpu_custom_call.1} parent=31 // pred_check_branch
          %949 = sbr.rel (%p947) target = $region44
        $region43: #{tpu_custom_call.1} parent=31 // pred_region
          _
        $region44: #{tpu_custom_call.1} parent=31 // pred_fallthru
          _
      $region32: #{tpu_custom_call.1} parent=5 // pred_fallthru
        _
      %p950 = scmp.le.s32.totalorder 2, %s12
      // Predicated region
      $region45: #{tpu_custom_call.1} parent=5 // pred_check
        %p951 = pneg %p950
      $region46: #{tpu_custom_call.1} parent=5 // pred_check_branch
        %953 = sbr.rel (%p951) target = $region48
      $region47: #{tpu_custom_call.1} parent=5 // pred_region
        %s954 = ssub.s32 %s12, 2
        // Predicated region
        $region49: #{tpu_custom_call.1} parent=47 // pred_check
          %p955 = pneg %p123
        $region50: #{tpu_custom_call.1} parent=47 // pred_check_branch
          %957 = sbr.rel (%p955) target = $region52
        $region51: #{tpu_custom_call.1} parent=47 // pred_region
          %p958 = scmp.lt.s32.totalorder %s23, 1
          %s959 = scalar_select %p958, %s23, 1
          %s960 = smul.addr %s959, 32
          %s961 = smul.addr %s960, 8
          %s962 = scalar_lea.vmem %s3, %s961
        $region52: #{tpu_custom_call.1} parent=47 // pred_fallthru
          _
      $region48: #{tpu_custom_call.1} parent=5 // pred_fallthru
        _
    $region6: #{tpu_custom_call.1} parent=1 // loop_footer
      %s16 = sadd.s32 1, %s12
    $region7: #{tpu_custom_call.1} parent=1 // loop_footer_branch
      %11 = sbr.rel target = $region3
    $region8: #{tpu_custom_call.1} parent=1 // loop_exit
      _
    %963 = vsyncpa [#allocation3], 1
    %s964 = scalar_lea.sflag [#allocation3], 1
    %965 = vsyncpa %s964, 1

</llo_original>
